<compile_context>
chip_gen: v7x
topology: tpu7x:2x2x1
jax: 0.10.0
libtpu: 0.0.40
codegen_flags: <defaults>
</compile_context>

<pallas_src>
import functools

import jax
import jax.numpy as jnp
from jax.experimental import pallas as pl
from jax.experimental.pallas import tpu as pltpu

BN_EPS = 1e-5


# ----------------------------------------------------------------------------
# Kernel
# ----------------------------------------------------------------------------
def mlp_kernel(n_hidden, x_ref, *refs):
    """Fused MLP forward for one batch tile.

    refs layout:
      for each hidden layer i in [0, n_hidden):  w_i (in, out), b_i (1, out)
      then: w_out_pad (8, n_units)  (row 0 = folded output weights, rows 1-7 = 0)
            b_out (1, 1)
      last: o_ref (8, batch_tile)   lane-dense output block (row 0 is real)
    """
    o_ref = refs[-1]
    params = refs[:-1]

    h = x_ref[...]                            # already in compute dtype
    compute_dtype = h.dtype
    idx = 0
    for _ in range(n_hidden):
        w_ref, b_ref = params[idx], params[idx + 1]
        idx += 2
        wv = w_ref[...]                       # f32 or bf16 (compute dtype)
        # Linear (BN already folded into wv / b) + ReLU; accumulate in f32,
        # carry the activation in the compute dtype.
        acc = jnp.dot(h, wv, preferred_element_type=jnp.float32) + b_ref[...]
        h = jnp.maximum(acc, 0.0).astype(compute_dtype)

    w_out_ref, b_out_ref = params[idx], params[idx + 1]
    # Final layer as (8, n_units) contracted with h's feature dim (q@k^T
    # pattern): result (8, batch_tile); only row 0 is real.  This produces a
    # lane-dense output directly (no masked N=1 stores).  Store all 8 rows
    # (unmasked full-vreg stores); the wrapper keeps row 0.
    y = jax.lax.dot_general(
        w_out_ref[...], h,
        dimension_numbers=(((1,), (1,)), ((), ())),
        preferred_element_type=jnp.float32)
    o_ref[...] = (y + b_out_ref[...]).astype(o_ref.dtype)


# ----------------------------------------------------------------------------
# Parameter construction (PyTorch layouts) and BN-folding prep
# ----------------------------------------------------------------------------
def build_raw_params(key, input_dim, n_layers=3, n_units=128):
    """Parameters in PyTorch layout: Linear W (out, in), b (out,); BN vectors (out,)."""
    hidden = []
    in_dim = input_dim
    for _ in range(n_layers):
        key, kw, kb, kg, kbe, km, kv = jax.random.split(key, 7)
        bound = float(in_dim) ** -0.5
        hidden.append(dict(
            w=jax.random.uniform(kw, (n_units, in_dim), jnp.float32, -bound, bound),
            b=jax.random.uniform(kb, (n_units,), jnp.float32, -bound, bound),
            gamma=jax.random.uniform(kg, (n_units,), jnp.float32, 0.5, 1.5),
            beta=0.1 * jax.random.normal(kbe, (n_units,), jnp.float32),
            mean=0.1 * jax.random.normal(km, (n_units,), jnp.float32),
            var=jax.random.uniform(kv, (n_units,), jnp.float32, 0.5, 1.5),
        ))
        in_dim = n_units
    key, kw, kb = jax.random.split(key, 3)
    bound = float(in_dim) ** -0.5
    out = dict(
        w=jax.random.uniform(kw, (1, in_dim), jnp.float32, -bound, bound),
        b=jax.random.uniform(kb, (1,), jnp.float32, -bound, bound),
    )
    return hidden, out


def prepare_params(raw_hidden, raw_out, *, compute_dtype=jnp.float32):
    """Fold eval-mode BatchNorm into the following Linear; pre-transpose weights.

    Layer i:  y = BN_i(relu(x @ W_i^T + b_i)) = relu(x @ W_i^T + b_i)*scale_i + shift_i
    Folding scale_i/shift_i into layer i+1:
        W_{i+1,eff} = scale_i[:, None] * W_{i+1}^T
        b_{i+1,eff} = shift_i @ W_{i+1}^T + b_{i+1}
    All matmul weights (including the padded output row) are cast to
    `compute_dtype` (bf16 MXU fast path on all generations); biases stay f32.
    """
    params = []
    scale_prev = None
    shift_prev = None
    for layer in raw_hidden:
        w_t = layer["w"].T.astype(jnp.float32)          # (in, out)
        b = layer["b"].astype(jnp.float32)              # (out,)
        if scale_prev is None:
            w_eff, b_eff = w_t, b
        else:
            w_eff = scale_prev[:, None] * w_t
            b_eff = shift_prev @ w_t + b
        params.append(w_eff.astype(compute_dtype))
        params.append(b_eff.reshape(1, -1).astype(jnp.float32))
        scale_prev = layer["gamma"] * jax.lax.rsqrt(layer["var"] + BN_EPS)
        shift_prev = layer["beta"] - layer["mean"] * scale_prev

    w_row = raw_out["w"][0].astype(jnp.float32)         # (in,)
    b_out = raw_out["b"].astype(jnp.float32)            # (1,)
    w_row_eff = scale_prev * w_row
    b_out_eff = jnp.dot(shift_prev, w_row) + b_out[0]
    n_in = w_row_eff.shape[0]
    # Pad the output row to 8 sublanes (rows 1-7 zero) -> fully aligned matmul.
    w_out_pad = jnp.zeros((8, n_in), jnp.float32).at[0].set(w_row_eff)
    params.append(w_out_pad.astype(compute_dtype))
    params.append(jnp.reshape(b_out_eff, (1, 1)))
    return params


# ----------------------------------------------------------------------------
# Wrapper
# ----------------------------------------------------------------------------
@functools.partial(jax.jit, static_argnames=("n_layers", "batch_tile"))
def mlp_forward(x, params, *, n_layers, batch_tile=256):
    # batch_tile notes:
    #   v6e/v7x: 256-512 fills the 256-wide MXU M dim; v5e: >=128 matches its
    #   128x128 MXU, larger only amortizes step overhead.  On v7x keep the
    #   number of grid steps >= 2 (ideally even) so both TensorCores are used.
    #   VMEM is not a constraint at these sizes on any generation.
    B, D = x.shape
    num_tiles = pl.cdiv(B, batch_tile)
    B_pad = num_tiles * batch_tile
    if B_pad != B:
        x = jnp.pad(x, ((0, B_pad - B), (0, 0)))
    compute_dtype = params[0].dtype
    x = x.astype(compute_dtype)               # carry activations in compute dtype

    x_spec = pl.BlockSpec((batch_tile, D), lambda i: (i, 0))
    # All parameters: full block, constant index map (resident, no re-DMA).
    # Single-buffered: double-buffering a never-changing block wastes VMEM.
    param_specs = [
        pl.BlockSpec(p.shape, lambda i: (0, 0), pipeline_mode=pl.Buffered(1))
        for p in params
    ]
    # Lane-dense output slab: one (8, batch_tile) block per grid step
    # (unmasked full-width stores); row 0 holds the real result.
    out_spec = pl.BlockSpec((8, batch_tile), lambda i: (0, i))

    kernel = functools.partial(mlp_kernel, n_layers)

    out = pl.pallas_call(
        kernel,
        out_shape=jax.ShapeDtypeStruct((8, B_pad), jnp.float32),
        grid_spec=pltpu.PrefetchScalarGridSpec(
            num_scalar_prefetch=0,
            grid=(num_tiles,),
            in_specs=[x_spec] + param_specs,
            out_specs=out_spec,
        ),
        compiler_params=pltpu.CompilerParams(
            dimension_semantics=("parallel",)),
    )(x, *params)

    return out[0, :B].reshape(B, 1)


# ----------------------------------------------------------------------------
# Pure-JAX reference (unfolded, f32, PyTorch layout)
# ----------------------------------------------------------------------------
def reference_forward(x, raw_hidden, raw_out):
    h = x
    for layer in raw_hidden:
        h = h @ layer["w"].T + layer["b"]
        h = jnp.maximum(h, 0.0)
        h = ((h - layer["mean"]) * jax.lax.rsqrt(layer["var"] + BN_EPS)
             * layer["gamma"] + layer["beta"])
    return h @ raw_out["w"].T + raw_out["b"]


if __name__ == "__main__":
    key = jax.random.PRNGKey(0)
    key, kx, kp = jax.random.split(key, 3)

    batch = 200          # not a tile multiple on purpose (exercises padding)
    input_dim = 32
    n_layers = 3
    n_units = 128

    x = jax.random.normal(kx, (batch, input_dim), jnp.float32)
    raw_hidden, raw_out = build_raw_params(kp, input_dim, n_layers, n_units)
    ref = reference_forward(x, raw_hidden, raw_out)

    # fp32 compute path: tight check vs. reference (2 grid steps at bt=128).
    params_f32 = prepare_params(raw_hidden, raw_out, compute_dtype=jnp.float32)
    out_f32 = jax.block_until_ready(
        mlp_forward(x, params_f32, n_layers=n_layers, batch_tile=128))
    assert out_f32.shape == (batch, 1)
    assert jnp.allclose(out_f32, ref, atol=3e-4, rtol=3e-4), (
        float(jnp.max(jnp.abs(out_f32 - ref))))

    # bf16 weights + activations (MXU fast path on v5e/v6e/v7x), f32 accum.
    params_bf16 = prepare_params(raw_hidden, raw_out, compute_dtype=jnp.bfloat16)
    out_bf16 = jax.block_until_ready(
        mlp_forward(x, params_bf16, n_layers=n_layers, batch_tile=128))
    rel_err = float(jnp.linalg.norm(out_bf16 - ref)
                    / (jnp.linalg.norm(ref) + 1e-12))
    assert out_bf16.shape == (batch, 1)
    assert rel_err < 5e-2, rel_err

    # bf16 path again at the default (larger) tile: single 256-wide step.
    out_bf16_big = jax.block_until_ready(
        mlp_forward(x, params_bf16, n_layers=n_layers, batch_tile=256))
    rel_err_big = float(jnp.linalg.norm(out_bf16_big - ref)
                        / (jnp.linalg.norm(ref) + 1e-12))
    assert out_bf16_big.shape == (batch, 1)
    assert rel_err_big < 5e-2, rel_err_big

    print("KERNEL_OK")
</pallas_src>

<mosaic_0001>
module attributes {stable_mosaic.version = 11 : i64} {
  func.func @mlp_kernel(%arg0: i32, %arg1: memref<128x32xf32, #tpu.memory_space<vmem>>, %arg2: memref<32x128xf32, #tpu.memory_space<vmem>>, %arg3: memref<1x128xf32, #tpu.memory_space<vmem>>, %arg4: memref<128x128xf32, #tpu.memory_space<vmem>>, %arg5: memref<1x128xf32, #tpu.memory_space<vmem>>, %arg6: memref<128x128xf32, #tpu.memory_space<vmem>>, %arg7: memref<1x128xf32, #tpu.memory_space<vmem>>, %arg8: memref<8x128xf32, #tpu.memory_space<vmem>>, %arg9: memref<1x1xf32, #tpu.memory_space<vmem>>, %arg10: memref<8x128xf32, #tpu.memory_space<vmem>>) attributes {dimension_semantics = [#tpu.dimension_semantics<parallel>], iteration_bounds = array<i64: 2>, scalar_prefetch = 0 : i64, scratch_operands = 0 : i64, tpu.core_type = #tpu.core_type<tc>, window_params = [{transform_indices = @transform_0, window_bounds = array<i64: 128, 32>}, {pipeline_mode = #tpu.pipeline_mode<synchronous>, transform_indices = @transform_1, window_bounds = array<i64: 32, 128>}, {pipeline_mode = #tpu.pipeline_mode<synchronous>, transform_indices = @transform_2, window_bounds = array<i64: 1, 128>}, {pipeline_mode = #tpu.pipeline_mode<synchronous>, transform_indices = @transform_3, window_bounds = array<i64: 128, 128>}, {pipeline_mode = #tpu.pipeline_mode<synchronous>, transform_indices = @transform_4, window_bounds = array<i64: 1, 128>}, {pipeline_mode = #tpu.pipeline_mode<synchronous>, transform_indices = @transform_5, window_bounds = array<i64: 128, 128>}, {pipeline_mode = #tpu.pipeline_mode<synchronous>, transform_indices = @transform_6, window_bounds = array<i64: 1, 128>}, {pipeline_mode = #tpu.pipeline_mode<synchronous>, transform_indices = @transform_7, window_bounds = array<i64: 8, 128>}, {pipeline_mode = #tpu.pipeline_mode<synchronous>, transform_indices = @transform_8, window_bounds = array<i64: 1, 1>}, {transform_indices = @transform_9, window_bounds = array<i64: 8, 128>}]} {
    %c0 = arith.constant 0 : index
    %c0_0 = arith.constant 0 : index
    %0 = vector.load %arg1[%c0, %c0_0] : memref<128x32xf32, #tpu.memory_space<vmem>>, vector<128x32xf32>
    %c0_1 = arith.constant 0 : index
    %c0_2 = arith.constant 0 : index
    %1 = vector.load %arg2[%c0_1, %c0_2] : memref<32x128xf32, #tpu.memory_space<vmem>>, vector<32x128xf32>
    %cst = arith.constant dense<0.000000e+00> : vector<128x128xf32>
    %2 = tpu.matmul %0, %1, %cst {dimension_numbers = #tpu.dot_dimension_numbers<[1], [0], [0], [1], [0, 0, 1, 1], [], []>} : vector<128x32xf32>, vector<32x128xf32>, vector<128x128xf32> -> vector<128x128xf32>
    %c0_3 = arith.constant 0 : index
    %c0_4 = arith.constant 0 : index
    %3 = vector.load %arg3[%c0_3, %c0_4] : memref<1x128xf32, #tpu.memory_space<vmem>>, vector<1x128xf32>
    %4 = vector.broadcast %3 : vector<1x128xf32> to vector<128x128xf32>
    %5 = arith.addf %2, %4 : vector<128x128xf32>
    %cst_5 = arith.constant 0.000000e+00 : f32
    %6 = vector.broadcast %cst_5 : f32 to vector<128x128xf32>
    %7 = arith.maximumf %5, %6 : vector<128x128xf32>
    %c0_6 = arith.constant 0 : index
    %c0_7 = arith.constant 0 : index
    %8 = vector.load %arg4[%c0_6, %c0_7] : memref<128x128xf32, #tpu.memory_space<vmem>>, vector<128x128xf32>
    %cst_8 = arith.constant dense<0.000000e+00> : vector<128x128xf32>
    %9 = tpu.matmul %7, %8, %cst_8 {dimension_numbers = #tpu.dot_dimension_numbers<[1], [0], [0], [1], [0, 0, 1, 1], [], []>} : vector<128x128xf32>, vector<128x128xf32>, vector<128x128xf32> -> vector<128x128xf32>
    %c0_9 = arith.constant 0 : index
    %c0_10 = arith.constant 0 : index
    %10 = vector.load %arg5[%c0_9, %c0_10] : memref<1x128xf32, #tpu.memory_space<vmem>>, vector<1x128xf32>
    %11 = vector.broadcast %10 : vector<1x128xf32> to vector<128x128xf32>
    %12 = arith.addf %9, %11 : vector<128x128xf32>
    %cst_11 = arith.constant 0.000000e+00 : f32
    %13 = vector.broadcast %cst_11 : f32 to vector<128x128xf32>
    %14 = arith.maximumf %12, %13 : vector<128x128xf32>
    %c0_12 = arith.constant 0 : index
    %c0_13 = arith.constant 0 : index
    %15 = vector.load %arg6[%c0_12, %c0_13] : memref<128x128xf32, #tpu.memory_space<vmem>>, vector<128x128xf32>
    %cst_14 = arith.constant dense<0.000000e+00> : vector<128x128xf32>
    %16 = tpu.matmul %14, %15, %cst_14 {dimension_numbers = #tpu.dot_dimension_numbers<[1], [0], [0], [1], [0, 0, 1, 1], [], []>} : vector<128x128xf32>, vector<128x128xf32>, vector<128x128xf32> -> vector<128x128xf32>
    %c0_15 = arith.constant 0 : index
    %c0_16 = arith.constant 0 : index
    %17 = vector.load %arg7[%c0_15, %c0_16] : memref<1x128xf32, #tpu.memory_space<vmem>>, vector<1x128xf32>
    %18 = vector.broadcast %17 : vector<1x128xf32> to vector<128x128xf32>
    %19 = arith.addf %16, %18 : vector<128x128xf32>
    %cst_17 = arith.constant 0.000000e+00 : f32
    %20 = vector.broadcast %cst_17 : f32 to vector<128x128xf32>
    %21 = arith.maximumf %19, %20 : vector<128x128xf32>
    %c0_18 = arith.constant 0 : index
    %c0_19 = arith.constant 0 : index
    %22 = vector.load %arg8[%c0_18, %c0_19] : memref<8x128xf32, #tpu.memory_space<vmem>>, vector<8x128xf32>
    %cst_20 = arith.constant dense<0.000000e+00> : vector<8x128xf32>
    %23 = tpu.matmul %22, %21, %cst_20 {dimension_numbers = #tpu.dot_dimension_numbers<[1], [1], [0], [0], [0, 0, 1, 0], [], []>} : vector<8x128xf32>, vector<128x128xf32>, vector<8x128xf32> -> vector<8x128xf32>
    %c0_21 = arith.constant 0 : index
    %c0_22 = arith.constant 0 : index
    %24 = vector.load %arg9[%c0_21, %c0_22] : memref<1x1xf32, #tpu.memory_space<vmem>>, vector<1x1xf32>
    %25 = vector.broadcast %24 : vector<1x1xf32> to vector<8x128xf32>
    %26 = arith.addf %23, %25 : vector<8x128xf32>
    %c0_23 = arith.constant 0 : index
    %c0_24 = arith.constant 0 : index
    %27 = vector.load %arg10[%c0_23, %c0_24] : memref<8x128xf32, #tpu.memory_space<vmem>>, vector<8x128xf32>
    tpu.vector_store %arg10[%c0_23, %c0_24], %26 {strides = array<i32>} : memref<8x128xf32, #tpu.memory_space<vmem>>, vector<8x128xf32>,
    return
  }
  func.func @transform_0(%arg0: i32) -> (i32, i32) {
    %c0_i32 = arith.constant 0 : i32
    %c0_i32_0 = arith.constant 0 : i32
    return %arg0, %c0_i32 : i32, i32
  }
  func.func @transform_1(%arg0: i32) -> (i32, i32) {
    %c0_i32 = arith.constant 0 : i32
    %c0_i32_0 = arith.constant 0 : i32
    %c0_i32_1 = arith.constant 0 : i32
    return %c0_i32, %c0_i32_0 : i32, i32
  }
  func.func @transform_2(%arg0: i32) -> (i32, i32) {
    %c0_i32 = arith.constant 0 : i32
    %c0_i32_0 = arith.constant 0 : i32
    %c0_i32_1 = arith.constant 0 : i32
    return %c0_i32, %c0_i32_0 : i32, i32
  }
  func.func @transform_3(%arg0: i32) -> (i32, i32) {
    %c0_i32 = arith.constant 0 : i32
    %c0_i32_0 = arith.constant 0 : i32
    %c0_i32_1 = arith.constant 0 : i32
    return %c0_i32, %c0_i32_0 : i32, i32
  }
  func.func @transform_4(%arg0: i32) -> (i32, i32) {
    %c0_i32 = arith.constant 0 : i32
    %c0_i32_0 = arith.constant 0 : i32
    %c0_i32_1 = arith.constant 0 : i32
    return %c0_i32, %c0_i32_0 : i32, i32
  }
  func.func @transform_5(%arg0: i32) -> (i32, i32) {
    %c0_i32 = arith.constant 0 : i32
    %c0_i32_0 = arith.constant 0 : i32
    %c0_i32_1 = arith.constant 0 : i32
    return %c0_i32, %c0_i32_0 : i32, i32
  }
  func.func @transform_6(%arg0: i32) -> (i32, i32) {
    %c0_i32 = arith.constant 0 : i32
    %c0_i32_0 = arith.constant 0 : i32
    %c0_i32_1 = arith.constant 0 : i32
    return %c0_i32, %c0_i32_0 : i32, i32
  }
  func.func @transform_7(%arg0: i32) -> (i32, i32) {
    %c0_i32 = arith.constant 0 : i32
    %c0_i32_0 = arith.constant 0 : i32
    %c0_i32_1 = arith.constant 0 : i32
    return %c0_i32, %c0_i32_0 : i32, i32
  }
  func.func @transform_8(%arg0: i32) -> (i32, i32) {
    %c0_i32 = arith.constant 0 : i32
    %c0_i32_0 = arith.constant 0 : i32
    %c0_i32_1 = arith.constant 0 : i32
    return %c0_i32, %c0_i32_0 : i32, i32
  }
  func.func @transform_9(%arg0: i32) -> (i32, i32) {
    %c0_i32 = arith.constant 0 : i32
    %c0_i32_0 = arith.constant 0 : i32
    return %c0_i32, %arg0 : i32, i32
  }
}

</mosaic_0001>

<llo_original>
// kernel: mlp_forward.1
$region0: #{mlp_forward.1}
  #allocation0 [shape = 'u32[]', space=smem, size = 0x4, offset = 0x4, fixed_abs, tag = 'smem constant byte address 0x4 - core index']
  #allocation1 [shape = 'u32[144,128]{1,0:T(1,128)}', space=vmem, size = 0x12000, scoped, tag = 'internal scratch']
  #allocation2 [shape = 'f32[1,1]{1,0:T(1,128)S(1)}', space=vmem, size = 0x200, scoped, tag = 'scoped memory for mlp_forward.1']
  %s0 = inlined_call_operand.vmem [shape: f32[256,32], index: 0, kind: input, shape index: {}]
  %s1 = inlined_call_operand.vmem [shape: f32[32,128], index: 1, kind: input, shape index: {}]
  %s2 = inlined_call_operand.vmem [shape: f32[1,128], index: 2, kind: input, shape index: {}]
  %s3 = inlined_call_operand.vmem [shape: f32[128,128], index: 3, kind: input, shape index: {}]
  %s4 = inlined_call_operand.vmem [shape: f32[1,128], index: 4, kind: input, shape index: {}]
  %s5 = inlined_call_operand.vmem [shape: f32[128,128], index: 5, kind: input, shape index: {}]
  %s6 = inlined_call_operand.vmem [shape: f32[1,128], index: 6, kind: input, shape index: {}]
  %s7 = inlined_call_operand.vmem [shape: f32[8,128], index: 7, kind: input, shape index: {}]
  %s8 = inlined_call_operand.<no memory space> [shape: f32[1,1], index: 8, kind: input, shape index: {}]
  %s9 = inlined_call_operand.vmem [shape: f32[8,256], index: 9, kind: output, shape index: {}]
  %s10 = sld [smem:[#allocation0]]
  $region69: #{mlp_forward.1} parent=0
    _
  %s12 = ssub.s32 1, %s10
  %s13 = scalar_select 0, %s12, %s10
  %v14 = vstv %s8
  %15 = vst [vmem:[#allocation2] sm:$0x1] %v14
  loop: start=0, step=1, limit=4
  $region2: #{mlp_forward.1} parent=0 // loop_pre_header
    _
  $region3: #{mlp_forward.1} parent=0 // loop_header
    %s17 = sphi 0, %s21
    %p18 = scmp.ge.s32.totalorder %s17, 4
    %s27 = sphi 0, %s29
    %s30 = sphi 0, %s27
    %s31 = sphi 0, %s30
    %s47 = sphi 0, %s31
    %s51 = sphi 0, %s51
    %s53 = sphi 0, %s51
    %s54 = sphi 0, %s53
    %s68 = sphi 0, %s54
    %s72 = sphi 0, %s72
    %s74 = sphi 0, %s72
    %s75 = sphi 0, %s74
    %s89 = sphi 0, %s75
    %s93 = sphi 0, %s93
    %s95 = sphi 0, %s93
    %s96 = sphi 0, %s95
    %s110 = sphi 0, %s96
    %s114 = sphi 0, %s114
    %s116 = sphi 0, %s114
    %s117 = sphi 0, %s116
    %s131 = sphi 0, %s117
    %s135 = sphi 0, %s135
    %s137 = sphi 0, %s135
    %s138 = sphi 0, %s137
    %s152 = sphi 0, %s138
    %s156 = sphi 0, %s156
    %s158 = sphi 0, %s156
    %s159 = sphi 0, %s158
    %s173 = sphi 0, %s159
    %s177 = sphi 0, %s177
    %s179 = sphi 0, %s177
    %s180 = sphi 0, %s179
    %s194 = sphi 0, %s180
    %s198 = sphi 0, %s198
    %s200 = sphi 0, %s198
    %s201 = sphi 0, %s200
    %s215 = sphi 0, %s201
    %s221 = sphi 0, %s223
    %s224 = sphi 0, %s221
    %s225 = sphi 0, %s224
    %s241 = sphi 0, %s225
  $region4: #{mlp_forward.1} parent=0 // loop_header_branch
    %20 = sbr.rel (%p18) target = $region8
  $region5: #{mlp_forward.1} parent=0 // loop_body
    %s22 = ssub.s32 %s17, 1
    %s23 = ssub.s32 %s17, 2
    %s24 = sadd.s32 %s17, 1
    %s25 = ssub.s32 %s17, %s24
    %p26 = scmp.eq.s32.totalorder %s25, 0
    %s28 = sadd.s32 %s27, 1
    %s29 = scalar_select %p26, %s27, %s28
    %p32 = pneg %p26
    %p33 = scmp.eq.s32.totalorder %s17, 1
    %p34 = por %p32, %p33
    %p35 = scmp.ne.s32.totalorder %s27, %s30
    %p36 = scmp.eq.s32.totalorder %s17, 0
    %p37 = por %p35, %p36
    %p38 = scmp.ne.s32.totalorder %s27, %s30
    %p39 = scmp.eq.s32.totalorder %s22, 1
    %p40 = por %p38, %p39
    %p41 = scmp.ne.s32.totalorder %s30, %s31
    %p42 = scmp.eq.s32.totalorder %s22, 0
    %p43 = por %p41, %p42
    %p44 = scmp.ne.s32.totalorder %s30, %s31
    %p45 = scmp.eq.s32.totalorder %s23, 1
    %p46 = por %p44, %p45
    %p48 = scmp.ne.s32.totalorder %s31, %s47
    %p49 = scmp.eq.s32.totalorder %s23, 0
    %p50 = por %p48, %p49
    %s52 = sadd.s32 %s51, 1
    %p55 = scmp.eq.s32.totalorder %s17, 1
    %p56 = scmp.ne.s32.totalorder %s51, %s53
    %p57 = scmp.eq.s32.totalorder %s17, 0
    %p58 = por %p56, %p57
    %p59 = scmp.ne.s32.totalorder %s51, %s53
    %p60 = scmp.eq.s32.totalorder %s22, 1
    %p61 = por %p59, %p60
    %p62 = scmp.ne.s32.totalorder %s53, %s54
    %p63 = scmp.eq.s32.totalorder %s22, 0
    %p64 = por %p62, %p63
    %p65 = scmp.ne.s32.totalorder %s53, %s54
    %p66 = scmp.eq.s32.totalorder %s23, 1
    %p67 = por %p65, %p66
    %p69 = scmp.ne.s32.totalorder %s54, %s68
    %p70 = scmp.eq.s32.totalorder %s23, 0
    %p71 = por %p69, %p70
    %s73 = sadd.s32 %s72, 1
    %p76 = scmp.eq.s32.totalorder %s17, 1
    %p77 = scmp.ne.s32.totalorder %s72, %s74
    %p78 = scmp.eq.s32.totalorder %s17, 0
    %p79 = por %p77, %p78
    %p80 = scmp.ne.s32.totalorder %s72, %s74
    %p81 = scmp.eq.s32.totalorder %s22, 1
    %p82 = por %p80, %p81
    %p83 = scmp.ne.s32.totalorder %s74, %s75
    %p84 = scmp.eq.s32.totalorder %s22, 0
    %p85 = por %p83, %p84
    %p86 = scmp.ne.s32.totalorder %s74, %s75
    %p87 = scmp.eq.s32.totalorder %s23, 1
    %p88 = por %p86, %p87
    %p90 = scmp.ne.s32.totalorder %s75, %s89
    %p91 = scmp.eq.s32.totalorder %s23, 0
    %p92 = por %p90, %p91
    %s94 = sadd.s32 %s93, 1
    %p97 = scmp.eq.s32.totalorder %s17, 1
    %p98 = scmp.ne.s32.totalorder %s93, %s95
    %p99 = scmp.eq.s32.totalorder %s17, 0
    %p100 = por %p98, %p99
    %p101 = scmp.ne.s32.totalorder %s93, %s95
    %p102 = scmp.eq.s32.totalorder %s22, 1
    %p103 = por %p101, %p102
    %p104 = scmp.ne.s32.totalorder %s95, %s96
    %p105 = scmp.eq.s32.totalorder %s22, 0
    %p106 = por %p104, %p105
    %p107 = scmp.ne.s32.totalorder %s95, %s96
    %p108 = scmp.eq.s32.totalorder %s23, 1
    %p109 = por %p107, %p108
    %p111 = scmp.ne.s32.totalorder %s96, %s110
    %p112 = scmp.eq.s32.totalorder %s23, 0
    %p113 = por %p111, %p112
    %s115 = sadd.s32 %s114, 1
    %p118 = scmp.eq.s32.totalorder %s17, 1
    %p119 = scmp.ne.s32.totalorder %s114, %s116
    %p120 = scmp.eq.s32.totalorder %s17, 0
    %p121 = por %p119, %p120
    %p122 = scmp.ne.s32.totalorder %s114, %s116
    %p123 = scmp.eq.s32.totalorder %s22, 1
    %p124 = por %p122, %p123
    %p125 = scmp.ne.s32.totalorder %s116, %s117
    %p126 = scmp.eq.s32.totalorder %s22, 0
    %p127 = por %p125, %p126
    %p128 = scmp.ne.s32.totalorder %s116, %s117
    %p129 = scmp.eq.s32.totalorder %s23, 1
    %p130 = por %p128, %p129
    %p132 = scmp.ne.s32.totalorder %s117, %s131
    %p133 = scmp.eq.s32.totalorder %s23, 0
    %p134 = por %p132, %p133
    %s136 = sadd.s32 %s135, 1
    %p139 = scmp.eq.s32.totalorder %s17, 1
    %p140 = scmp.ne.s32.totalorder %s135, %s137
    %p141 = scmp.eq.s32.totalorder %s17, 0
    %p142 = por %p140, %p141
    %p143 = scmp.ne.s32.totalorder %s135, %s137
    %p144 = scmp.eq.s32.totalorder %s22, 1
    %p145 = por %p143, %p144
    %p146 = scmp.ne.s32.totalorder %s137, %s138
    %p147 = scmp.eq.s32.totalorder %s22, 0
    %p148 = por %p146, %p147
    %p149 = scmp.ne.s32.totalorder %s137, %s138
    %p150 = scmp.eq.s32.totalorder %s23, 1
    %p151 = por %p149, %p150
    %p153 = scmp.ne.s32.totalorder %s138, %s152
    %p154 = scmp.eq.s32.totalorder %s23, 0
    %p155 = por %p153, %p154
    %s157 = sadd.s32 %s156, 1
    %p160 = scmp.eq.s32.totalorder %s17, 1
    %p161 = scmp.ne.s32.totalorder %s156, %s158
    %p162 = scmp.eq.s32.totalorder %s17, 0
    %p163 = por %p161, %p162
    %p164 = scmp.ne.s32.totalorder %s156, %s158
    %p165 = scmp.eq.s32.totalorder %s22, 1
    %p166 = por %p164, %p165
    %p167 = scmp.ne.s32.totalorder %s158, %s159
    %p168 = scmp.eq.s32.totalorder %s22, 0
    %p169 = por %p167, %p168
    %p170 = scmp.ne.s32.totalorder %s158, %s159
    %p171 = scmp.eq.s32.totalorder %s23, 1
    %p172 = por %p170, %p171
    %p174 = scmp.ne.s32.totalorder %s159, %s173
    %p175 = scmp.eq.s32.totalorder %s23, 0
    %p176 = por %p174, %p175
    %s178 = sadd.s32 %s177, 1
    %p181 = scmp.eq.s32.totalorder %s17, 1
    %p182 = scmp.ne.s32.totalorder %s177, %s179
    %p183 = scmp.eq.s32.totalorder %s17, 0
    %p184 = por %p182, %p183
    %p185 = scmp.ne.s32.totalorder %s177, %s179
    %p186 = scmp.eq.s32.totalorder %s22, 1
    %p187 = por %p185, %p186
    %p188 = scmp.ne.s32.totalorder %s179, %s180
    %p189 = scmp.eq.s32.totalorder %s22, 0
    %p190 = por %p188, %p189
    %p191 = scmp.ne.s32.totalorder %s179, %s180
    %p192 = scmp.eq.s32.totalorder %s23, 1
    %p193 = por %p191, %p192
    %p195 = scmp.ne.s32.totalorder %s180, %s194
    %p196 = scmp.eq.s32.totalorder %s23, 0
    %p197 = por %p195, %p196
    %s199 = sadd.s32 %s198, 1
    %p202 = scmp.eq.s32.totalorder %s17, 1
    %p203 = scmp.ne.s32.totalorder %s198, %s200
    %p204 = scmp.eq.s32.totalorder %s17, 0
    %p205 = por %p203, %p204
    %p206 = scmp.ne.s32.totalorder %s198, %s200
    %p207 = scmp.eq.s32.totalorder %s22, 1
    %p208 = por %p206, %p207
    %p209 = scmp.ne.s32.totalorder %s200, %s201
    %p210 = scmp.eq.s32.totalorder %s22, 0
    %p211 = por %p209, %p210
    %p212 = scmp.ne.s32.totalorder %s200, %s201
    %p213 = scmp.eq.s32.totalorder %s23, 1
    %p214 = por %p212, %p213
    %p216 = scmp.ne.s32.totalorder %s201, %s215
    %p217 = scmp.eq.s32.totalorder %s23, 0
    %p218 = por %p216, %p217
    %s219 = ssub.s32 %s17, %s24
    %p220 = scmp.eq.s32.totalorder %s219, 0
    %s222 = sadd.s32 %s221, 1
    %s223 = scalar_select %p220, %s221, %s222
    %p226 = pneg %p220
    %p227 = scmp.eq.s32.totalorder %s17, 1
    %p228 = por %p226, %p227
    %p229 = scmp.ne.s32.totalorder %s221, %s224
    %p230 = scmp.eq.s32.totalorder %s17, 0
    %p231 = por %p229, %p230
    %p232 = scmp.ne.s32.totalorder %s221, %s224
    %p233 = scmp.eq.s32.totalorder %s22, 1
    %p234 = por %p232, %p233
    %p235 = scmp.ne.s32.totalorder %s224, %s225
    %p236 = scmp.eq.s32.totalorder %s22, 0
    %p237 = por %p235, %p236
    %p238 = scmp.ne.s32.totalorder %s224, %s225
    %p239 = scmp.eq.s32.totalorder %s23, 1
    %p240 = por %p238, %p239
    %p242 = scmp.ne.s32.totalorder %s225, %s241
    %p243 = scmp.eq.s32.totalorder %s23, 0
    %p244 = por %p242, %p243
    %p245 = scmp.le.s32.totalorder 1, %s17
    %p246 = scmp.lt.s32.totalorder %s17, 3
    %p247 = pnand %p245, %p246
    %p248 = pneg %p247
    // Predicated region
    $region9: #{mlp_forward.1} parent=5 // pred_check
      _
    $region10: #{mlp_forward.1} parent=5 // pred_check_branch
      %250 = sbr.rel (%p247) target = $region12
    $region11: #{mlp_forward.1} parent=5 // pred_region
      %s251 = ssub.s32 %s17, 1
      // Predicated region
      $region13: #{mlp_forward.1} parent=11 // pred_check
        %p252 = pneg %p64
      $region14: #{mlp_forward.1} parent=11 // pred_check_branch
        %254 = sbr.rel (%p252) target = $region16
      $region15: #{mlp_forward.1} parent=11 // pred_region
        _
      $region16: #{mlp_forward.1} parent=11 // pred_fallthru
        _
      // Predicated region
      $region17: #{mlp_forward.1} parent=11 // pred_check
        %p255 = pneg %p85
      $region18: #{mlp_forward.1} parent=11 // pred_check_branch
        %257 = sbr.rel (%p255) target = $region20
      $region19: #{mlp_forward.1} parent=11 // pred_region
        _
      $region20: #{mlp_forward.1} parent=11 // pred_fallthru
        _
      // Predicated region
      $region21: #{mlp_forward.1} parent=11 // pred_check
        %p258 = pneg %p106
      $region22: #{mlp_forward.1} parent=11 // pred_check_branch
        %260 = sbr.rel (%p258) target = $region24
      $region23: #{mlp_forward.1} parent=11 // pred_region
        _
      $region24: #{mlp_forward.1} parent=11 // pred_fallthru
        _
      // Predicated region
      $region25: #{mlp_forward.1} parent=11 // pred_check
        %p261 = pneg %p127
      $region26: #{mlp_forward.1} parent=11 // pred_check_branch
        %263 = sbr.rel (%p261) target = $region28
      $region27: #{mlp_forward.1} parent=11 // pred_region
        _
      $region28: #{mlp_forward.1} parent=11 // pred_fallthru
        _
      // Predicated region
      $region29: #{mlp_forward.1} parent=11 // pred_check
        %p264 = pneg %p148
      $region30: #{mlp_forward.1} parent=11 // pred_check_branch
        %266 = sbr.rel (%p264) target = $region32
      $region31: #{mlp_forward.1} parent=11 // pred_region
        _
      $region32: #{mlp_forward.1} parent=11 // pred_fallthru
        _
      // Predicated region
      $region33: #{mlp_forward.1} parent=11 // pred_check
        %p267 = pneg %p169
      $region34: #{mlp_forward.1} parent=11 // pred_check_branch
        %269 = sbr.rel (%p267) target = $region36
      $region35: #{mlp_forward.1} parent=11 // pred_region
        _
      $region36: #{mlp_forward.1} parent=11 // pred_fallthru
        _
      // Predicated region
      $region37: #{mlp_forward.1} parent=11 // pred_check
        %p270 = pneg %p190
      $region38: #{mlp_forward.1} parent=11 // pred_check_branch
        %272 = sbr.rel (%p270) target = $region40
      $region39: #{mlp_forward.1} parent=11 // pred_region
        _
      $region40: #{mlp_forward.1} parent=11 // pred_fallthru
        _
      // Predicated region
      $region41: #{mlp_forward.1} parent=11 // pred_check
        %p273 = pneg %p211
      $region42: #{mlp_forward.1} parent=11 // pred_check_branch
        %275 = sbr.rel (%p273) target = $region44
      $region43: #{mlp_forward.1} parent=11 // pred_region
        _
      $region44: #{mlp_forward.1} parent=11 // pred_fallthru
        _
    $region12: #{mlp_forward.1} parent=5 // pred_fallthru
      _
    %p276 = scmp.lt.s32.totalorder %s17, 2
    // Predicated region
    $region45: #{mlp_forward.1} parent=5 // pred_check
      %p277 = pneg %p276
    $region46: #{mlp_forward.1} parent=5 // pred_check_branch
      %279 = sbr.rel (%p277) target = $region48
    $region47: #{mlp_forward.1} parent=5 // pred_region
      // Predicated region
      $region49: #{mlp_forward.1} parent=47 // pred_check
        %p280 = pneg %p37
      $region50: #{mlp_forward.1} parent=47 // pred_check_branch
        %282 = sbr.rel (%p280) target = $region52
      $region51: #{mlp_forward.1} parent=47 // pred_region
        %s283 = smul.u32 16, %s17
        %p284 = scmp.lt.s32.totalorder %s283, 31
        %s285 = scalar_select %p284, %s283, 31
        %s286 = smul.addr %s285, 8
        %s287 = scalar_lea.vmem %s0, %s286
        %s288 = smul.u32 16, %s17
      $region52: #{mlp_forward.1} parent=47 // pred_fallthru
        _
    $region48: #{mlp_forward.1} parent=5 // pred_fallthru
      _
    %p289 = scmp.le.s32.totalorder 1, %s17
    %p290 = scmp.lt.s32.totalorder %s17, 3
    %p291 = pnand %p289, %p290
    %p292 = pneg %p291
    // Predicated region
    $region53: #{mlp_forward.1} parent=5 // pred_check
      _
    $region54: #{mlp_forward.1} parent=5 // pred_check_branch
      %294 = sbr.rel (%p291) target = $region56
    $region55: #{mlp_forward.1} parent=5 // pred_region
      %s295 = ssub.s32 %s17, 1
      %s296 = smul.u32 16, %s22
      %p297 = scmp.lt.s32.totalorder %s296, 31
      %s298 = scalar_select %p297, %s296, 31
      %s299 = smul.addr %s298, 8
      %s300 = scalar_lea.vmem %s0, %s299
      %p301 = pneg %p43
      %p302 = pneg %p40
      %p303 = pneg %p64
      %p304 = pneg %p61
      %p305 = pneg %p85
      %p306 = pneg %p82
      %p307 = pneg %p106
      %p308 = pneg %p103
      %p309 = pneg %p127
      %p310 = pneg %p124
      %p311 = pneg %p148
      %p312 = pneg %p145
      %p313 = pneg %p169
      %p314 = pneg %p166
      %p315 = pneg %p190
      %p316 = pneg %p187
      %p317 = pneg %p211
      %p318 = pneg %p208
      %p319 = pneg %p237
      %p320 = pneg %p234
      %p321 = scmp.lt.s32.totalorder %s22, 1
      %s322 = scalar_select %p321, %s22, 1
      %s323 = smul.addr %s322, 8
      %s324 = scalar_lea.vmem %s9, %s323
      %s325 = smul.u32 16, %s22
      %p326 = scmp.lt.s32.totalorder %s325, 31
      %s327 = scalar_select %p326, %s325, 31
      %s328 = smul.addr %s327, 8
      %s329 = scalar_lea.vmem %s0, %s328
      %s330 = smul.u32 16, %s22
      %p331 = scmp.lt.s32.totalorder %s22, 1
      %s332 = scalar_select %p331, %s22, 1
      %s333 = smul.addr %s332, 8
      %s334 = scalar_lea.vmem %s9, %s333
      %v335 = vld [vmem:[%s329] sm:$0xff]
      %v336 = vld [vmem:[%s329 + $0x8] sm:$0xff]
      %v337 = vld [vmem:[%s329 + $0x10] sm:$0xff]
      %v338 = vld [vmem:[%s329 + $0x18] sm:$0xff]
      %v339 = vld [vmem:[%s329 + $0x20] sm:$0xff]
      %v340 = vld [vmem:[%s329 + $0x28] sm:$0xff]
      %v341 = vld [vmem:[%s329 + $0x30] sm:$0xff]
      %v342 = vld [vmem:[%s329 + $0x38] sm:$0xff]
      %v343 = vld [vmem:[%s329 + $0x40] sm:$0xff]
      %v344 = vld [vmem:[%s329 + $0x48] sm:$0xff]
      %v345 = vld [vmem:[%s329 + $0x50] sm:$0xff]
      %v346 = vld [vmem:[%s329 + $0x58] sm:$0xff]
      %v347 = vld [vmem:[%s329 + $0x60] sm:$0xff]
      %v348 = vld [vmem:[%s329 + $0x68] sm:$0xff]
      %v349 = vld [vmem:[%s329 + $0x70] sm:$0xff]
      %v350 = vld [vmem:[%s329 + $0x78] sm:$0xff]
      %v351 = vld [vmem:[%s1] sm:$0xff]
      %v352 = vld [vmem:[%s1 + $0x8] sm:$0xff]
      %v353 = vld [vmem:[%s1 + $0x10] sm:$0xff]
      %v354 = vld [vmem:[%s1 + $0x18] sm:$0xff]
      %v355 = vld [vmem:[%s2] sm:$0x1]
      %v357 = vlaneseq
      %v358 = vshrl.u32 %v357, 7
      %v359 = vsub.s32 0, %v358
      %v360 = vrot.slane %v355, %v359
      %vm362 = vcmask 261120
      %v364 = vsel %vm362, %v335, 0
      %v367 = vsel %vm362, %v336, 0
      %v370 = vsel %vm362, %v337, 0
      %v373 = vsel %vm362, %v338, 0
      %v376 = vsel %vm362, %v339, 0
      %v379 = vsel %vm362, %v340, 0
      %v382 = vsel %vm362, %v341, 0
      %v385 = vsel %vm362, %v342, 0
      %v388 = vsel %vm362, %v343, 0
      %v391 = vsel %vm362, %v344, 0
      %v394 = vsel %vm362, %v345, 0
      %v397 = vsel %vm362, %v346, 0
      %v400 = vsel %vm362, %v347, 0
      %v403 = vsel %vm362, %v348, 0
      %v406 = vsel %vm362, %v349, 0
      %v409 = vsel %vm362, %v350, 0
      %411 = vmatprep.subr.mxu0 0.0
      %412 = vmatpush1.msra.mxu0 %v351
      %413 = vmatprep.subr.mxu0 0.0
      %414 = vmatpush1.msra.mxu0 %v352
      %415 = vmatprep.subr.mxu0 0.0
      %416 = vmatpush1.msra.mxu0 %v353
      %417 = vmatprep.subr.mxu0 0.0
      %418 = vmatpush1.msra.mxu0 %v354
      %419 = vmatprep.subr.mxu0 0.0
      %420 = vmatpush1.msra.mxu0 0.0
      %421 = vmatprep.subr.mxu0 0.0
      %422 = vmatpush1.msra.mxu0 0.0
      %423 = vmatprep.subr.mxu0 0.0
      %424 = vmatpush1.msra.mxu0 0.0
      %425 = vmatprep.subr.mxu0 0.0
      %426 = vmatpush1.msra.mxu0 0.0
      %427 = vmatprep.subr.mxu0 0.0
      %428 = vmatpush1.msra.mxu0 0.0
      %429 = vmatprep.subr.mxu0 0.0
      %430 = vmatpush1.msra.mxu0 0.0
      %431 = vmatprep.subr.mxu0 0.0
      %432 = vmatpush1.msra.mxu0 0.0
      %433 = vmatprep.subr.mxu0 0.0
      %434 = vmatpush1.msra.mxu0 0.0
      %435 = vmatprep.subr.mxu0 0.0
      %436 = vmatpush1.msra.mxu0 0.0
      %437 = vmatprep.subr.mxu0 0.0
      %438 = vmatpush1.msra.mxu0 0.0
      %439 = vmatprep.subr.mxu0 0.0
      %440 = vmatpush1.msra.mxu0 0.0
      %441 = vmatprep.subr.mxu0 0.0
      %442 = vmatpush1.msra.mxu0 0.0
      %443 = vmatprep.subr.mxu0 0.0
      %444 = vmatpush1.msra.mxu0 0.0
      %445 = vmatprep.subr.mxu0 0.0
      %446 = vmatpush1.msra.mxu0 0.0
      %447 = vmatprep.subr.mxu0 0.0
      %448 = vmatpush1.msra.mxu0 0.0
      %449 = vmatprep.subr.mxu0 0.0
      %450 = vmatpush1.msra.mxu0 0.0
      %451 = vmatprep.subr.mxu0 0.0
      %452 = vmatpush1.msra.mxu0 0.0
      %453 = vmatprep.subr.mxu0 0.0
      %454 = vmatpush1.msra.mxu0 0.0
      %455 = vmatprep.subr.mxu0 0.0
      %456 = vmatpush1.msra.mxu0 0.0
      %457 = vmatprep.subr.mxu0 0.0
      %458 = vmatpush1.msra.mxu0 0.0
      %459 = vmatprep.subr.mxu0 0.0
      %460 = vmatpush1.msra.mxu0 0.0
      %461 = vmatprep.subr.mxu0 0.0
      %462 = vmatpush1.msra.mxu0 0.0
      %463 = vmatprep.subr.mxu0 0.0
      %464 = vmatpush1.msra.mxu0 0.0
      %465 = vmatprep.subr.mxu0 0.0
      %466 = vmatpush1.msra.mxu0 0.0
      %467 = vmatprep.subr.mxu0 0.0
      %468 = vmatpush1.msra.mxu0 0.0
      %469 = vmatprep.subr.mxu0 0.0
      %470 = vmatpush1.msra.mxu0 0.0
      %471 = vmatprep.subr.mxu0 0.0
      %472 = vmatpush1.msra.mxu0 0.0
      %473 = vmatprep.subr.mxu0 0.0
      %474 = vmatpush1.msra.mxu0 0.0
      %475 = vmatprep.mubr.f32.mxu0 0.0
      %476 = vmatmul.mubr.f32.gmra.mrb[0].mxu0 %v364
      %v477 = vpop.f32.mrb[0].mxu0
      %v478 = vadd.f32 %v360, %v477
      %v479 = vpop.f32.mrb[0].mxu0
      %480 = vmatprep.mubr.f32.mxu0 0.0
      %481 = vmatmul.mubr.f32.gmra.mrb[0].mxu0 %v367
      %v482 = vpop.f32.mrb[0].mxu0
      %v483 = vadd.f32 %v360, %v482
      %v484 = vpop.f32.mrb[0].mxu0
      %485 = vmatprep.mubr.f32.mxu0 0.0
      %486 = vmatmul.mubr.f32.gmra.mrb[0].mxu0 %v370
      %v487 = vpop.f32.mrb[0].mxu0
      %v488 = vadd.f32 %v360, %v487
      %v489 = vpop.f32.mrb[0].mxu0
      %490 = vmatprep.mubr.f32.mxu0 0.0
      %491 = vmatmul.mubr.f32.gmra.mrb[0].mxu0 %v373
      %v492 = vpop.f32.mrb[0].mxu0
      %v493 = vadd.f32 %v360, %v492
      %v494 = vpop.f32.mrb[0].mxu0
      %495 = vmatprep.mubr.f32.mxu0 0.0
      %496 = vmatmul.mubr.f32.gmra.mrb[0].mxu0 %v376
      %v497 = vpop.f32.mrb[0].mxu0
      %v498 = vadd.f32 %v360, %v497
      %v499 = vpop.f32.mrb[0].mxu0
      %500 = vmatprep.mubr.f32.mxu0 0.0
      %501 = vmatmul.mubr.f32.gmra.mrb[0].mxu0 %v379
      %v502 = vpop.f32.mrb[0].mxu0
      %v503 = vadd.f32 %v360, %v502
      %v504 = vpop.f32.mrb[0].mxu0
      %505 = vmatprep.mubr.f32.mxu0 0.0
      %506 = vmatmul.mubr.f32.gmra.mrb[0].mxu0 %v382
      %v507 = vpop.f32.mrb[0].mxu0
      %v508 = vadd.f32 %v360, %v507
      %v509 = vpop.f32.mrb[0].mxu0
      %510 = vmatprep.mubr.f32.mxu0 0.0
      %511 = vmatmul.mubr.f32.gmra.mrb[0].mxu0 %v385
      %v512 = vpop.f32.mrb[0].mxu0
      %v513 = vadd.f32 %v360, %v512
      %v514 = vpop.f32.mrb[0].mxu0
      %515 = vmatprep.mubr.f32.mxu0 0.0
      %516 = vmatmul.mubr.f32.gmra.mrb[0].mxu0 %v388
      %v517 = vpop.f32.mrb[0].mxu0
      %v518 = vadd.f32 %v360, %v517
      %v519 = vpop.f32.mrb[0].mxu0
      %520 = vmatprep.mubr.f32.mxu0 0.0
      %521 = vmatmul.mubr.f32.gmra.mrb[0].mxu0 %v391
      %v522 = vpop.f32.mrb[0].mxu0
      %v523 = vadd.f32 %v360, %v522
      %v524 = vpop.f32.mrb[0].mxu0
      %525 = vmatprep.mubr.f32.mxu0 0.0
      %526 = vmatmul.mubr.f32.gmra.mrb[0].mxu0 %v394
      %v527 = vpop.f32.mrb[0].mxu0
      %v528 = vadd.f32 %v360, %v527
      %v529 = vpop.f32.mrb[0].mxu0
      %530 = vmatprep.mubr.f32.mxu0 0.0
      %531 = vmatmul.mubr.f32.gmra.mrb[0].mxu0 %v397
      %v532 = vpop.f32.mrb[0].mxu0
      %v533 = vadd.f32 %v360, %v532
      %v534 = vpop.f32.mrb[0].mxu0
      %535 = vmatprep.mubr.f32.mxu0 0.0
      %536 = vmatmul.mubr.f32.gmra.mrb[0].mxu0 %v400
      %v537 = vpop.f32.mrb[0].mxu0
      %v538 = vadd.f32 %v360, %v537
      %v539 = vpop.f32.mrb[0].mxu0
      %540 = vmatprep.mubr.f32.mxu0 0.0
      %541 = vmatmul.mubr.f32.gmra.mrb[0].mxu0 %v403
      %v542 = vpop.f32.mrb[0].mxu0
      %v543 = vadd.f32 %v360, %v542
      %v544 = vpop.f32.mrb[0].mxu0
      %545 = vmatprep.mubr.f32.mxu0 0.0
      %546 = vmatmul.mubr.f32.gmra.mrb[0].mxu0 %v406
      %v547 = vpop.f32.mrb[0].mxu0
      %v548 = vadd.f32 %v360, %v547
      %v549 = vpop.f32.mrb[0].mxu0
      %550 = vmatprep.mubr.f32.mxu0 0.0
      %551 = vmatmul.mubr.f32.gmra.mrb[0].mxu0 %v409
      %v552 = vpop.f32.mrb[0].mxu0
      %v553 = vadd.f32 %v360, %v552
      %v554 = vpop.f32.mrb[0].mxu0
      %555 = vdwg.mxu0
      %v556 = vmax.f32 %v478, 0.0
      %v557 = vmax.f32 %v483, 0.0
      %v558 = vmax.f32 %v488, 0.0
      %v559 = vmax.f32 %v493, 0.0
      %v560 = vmax.f32 %v498, 0.0
      %v561 = vmax.f32 %v503, 0.0
      %v562 = vmax.f32 %v508, 0.0
      %v563 = vmax.f32 %v513, 0.0
      %v564 = vmax.f32 %v518, 0.0
      %v565 = vmax.f32 %v523, 0.0
      %v566 = vmax.f32 %v528, 0.0
      %v567 = vmax.f32 %v533, 0.0
      %v568 = vmax.f32 %v538, 0.0
      %v569 = vmax.f32 %v543, 0.0
      %v570 = vmax.f32 %v548, 0.0
      %v571 = vmax.f32 %v553, 0.0
      %v572 = vld [vmem:[%s3] sm:$0xff]
      %v573 = vld [vmem:[%s3 + $0x8] sm:$0xff]
      %v574 = vld [vmem:[%s3 + $0x10] sm:$0xff]
      %v575 = vld [vmem:[%s3 + $0x18] sm:$0xff]
      %v576 = vld [vmem:[%s3 + $0x20] sm:$0xff]
      %v577 = vld [vmem:[%s3 + $0x28] sm:$0xff]
      %v578 = vld [vmem:[%s3 + $0x30] sm:$0xff]
      %v579 = vld [vmem:[%s3 + $0x38] sm:$0xff]
      %v580 = vld [vmem:[%s3 + $0x40] sm:$0xff]
      %v581 = vld [vmem:[%s3 + $0x48] sm:$0xff]
      %v582 = vld [vmem:[%s3 + $0x50] sm:$0xff]
      %v583 = vld [vmem:[%s3 + $0x58] sm:$0xff]
      %v584 = vld [vmem:[%s3 + $0x60] sm:$0xff]
      %v585 = vld [vmem:[%s3 + $0x68] sm:$0xff]
      %v586 = vld [vmem:[%s3 + $0x70] sm:$0xff]
      %v587 = vld [vmem:[%s3 + $0x78] sm:$0xff]
      %v588 = vld [vmem:[%s4] sm:$0x1]
      %v590 = vlaneseq
      %v591 = vshrl.u32 %v590, 7
      %v592 = vsub.s32 0, %v591
      %v593 = vrot.slane %v588, %v592
      %595 = vmatprep.subr.mxu0 0.0
      %596 = vmatpush1.msra.mxu0 %v572
      %597 = vmatprep.subr.mxu0 0.0
      %598 = vmatpush1.msra.mxu0 %v573
      %599 = vmatprep.subr.mxu0 0.0
      %600 = vmatpush1.msra.mxu0 %v574
      %601 = vmatprep.subr.mxu0 0.0
      %602 = vmatpush1.msra.mxu0 %v575
      %603 = vmatprep.subr.mxu0 0.0
      %604 = vmatpush1.msra.mxu0 %v576
      %605 = vmatprep.subr.mxu0 0.0
      %606 = vmatpush1.msra.mxu0 %v577
      %607 = vmatprep.subr.mxu0 0.0
      %608 = vmatpush1.msra.mxu0 %v578
      %609 = vmatprep.subr.mxu0 0.0
      %610 = vmatpush1.msra.mxu0 %v579
      %611 = vmatprep.subr.mxu0 0.0
      %612 = vmatpush1.msra.mxu0 %v580
      %613 = vmatprep.subr.mxu0 0.0
      %614 = vmatpush1.msra.mxu0 %v581
      %615 = vmatprep.subr.mxu0 0.0
      %616 = vmatpush1.msra.mxu0 %v582
      %617 = vmatprep.subr.mxu0 0.0
      %618 = vmatpush1.msra.mxu0 %v583
      %619 = vmatprep.subr.mxu0 0.0
      %620 = vmatpush1.msra.mxu0 %v584
      %621 = vmatprep.subr.mxu0 0.0
      %622 = vmatpush1.msra.mxu0 %v585
      %623 = vmatprep.subr.mxu0 0.0
      %624 = vmatpush1.msra.mxu0 %v586
      %625 = vmatprep.subr.mxu0 0.0
      %626 = vmatpush1.msra.mxu0 %v587
      %627 = vmatprep.subr.mxu0 0.0
      %628 = vmatpush1.msra.mxu0 0.0
      %629 = vmatprep.subr.mxu0 0.0
      %630 = vmatpush1.msra.mxu0 0.0
      %631 = vmatprep.subr.mxu0 0.0
      %632 = vmatpush1.msra.mxu0 0.0
      %633 = vmatprep.subr.mxu0 0.0
      %634 = vmatpush1.msra.mxu0 0.0
      %635 = vmatprep.subr.mxu0 0.0
      %636 = vmatpush1.msra.mxu0 0.0
      %637 = vmatprep.subr.mxu0 0.0
      %638 = vmatpush1.msra.mxu0 0.0
      %639 = vmatprep.subr.mxu0 0.0
      %640 = vmatpush1.msra.mxu0 0.0
      %641 = vmatprep.subr.mxu0 0.0
      %642 = vmatpush1.msra.mxu0 0.0
      %643 = vmatprep.subr.mxu0 0.0
      %644 = vmatpush1.msra.mxu0 0.0
      %645 = vmatprep.subr.mxu0 0.0
      %646 = vmatpush1.msra.mxu0 0.0
      %647 = vmatprep.subr.mxu0 0.0
      %648 = vmatpush1.msra.mxu0 0.0
      %649 = vmatprep.subr.mxu0 0.0
      %650 = vmatpush1.msra.mxu0 0.0
      %651 = vmatprep.subr.mxu0 0.0
      %652 = vmatpush1.msra.mxu0 0.0
      %653 = vmatprep.subr.mxu0 0.0
      %654 = vmatpush1.msra.mxu0 0.0
      %655 = vmatprep.subr.mxu0 0.0
      %656 = vmatpush1.msra.mxu0 0.0
      %657 = vmatprep.subr.mxu0 0.0
      %658 = vmatpush1.msra.mxu0 0.0
      %659 = vmatprep.mubr.f32.mxu0 0.0
      %660 = vmatmul.mubr.f32.gmra.mrb[0].mxu0 %v556
      %v661 = vpop.f32.mrb[0].mxu0
      %v662 = vadd.f32 %v593, %v661
      %v663 = vpop.f32.mrb[0].mxu0
      %664 = vmatprep.mubr.f32.mxu0 0.0
      %665 = vmatmul.mubr.f32.gmra.mrb[0].mxu0 %v557
      %v666 = vpop.f32.mrb[0].mxu0
      %v667 = vadd.f32 %v593, %v666
      %v668 = vpop.f32.mrb[0].mxu0
      %669 = vmatprep.mubr.f32.mxu0 0.0
      %670 = vmatmul.mubr.f32.gmra.mrb[0].mxu0 %v558
      %v671 = vpop.f32.mrb[0].mxu0
      %v672 = vadd.f32 %v593, %v671
      %v673 = vpop.f32.mrb[0].mxu0
      %674 = vmatprep.mubr.f32.mxu0 0.0
      %675 = vmatmul.mubr.f32.gmra.mrb[0].mxu0 %v559
      %v676 = vpop.f32.mrb[0].mxu0
      %v677 = vadd.f32 %v593, %v676
      %v678 = vpop.f32.mrb[0].mxu0
      %679 = vmatprep.mubr.f32.mxu0 0.0
      %680 = vmatmul.mubr.f32.gmra.mrb[0].mxu0 %v560
      %v681 = vpop.f32.mrb[0].mxu0
      %v682 = vadd.f32 %v593, %v681
      %v683 = vpop.f32.mrb[0].mxu0
      %684 = vmatprep.mubr.f32.mxu0 0.0
      %685 = vmatmul.mubr.f32.gmra.mrb[0].mxu0 %v561
      %v686 = vpop.f32.mrb[0].mxu0
      %v687 = vadd.f32 %v593, %v686
      %v688 = vpop.f32.mrb[0].mxu0
      %689 = vmatprep.mubr.f32.mxu0 0.0
      %690 = vmatmul.mubr.f32.gmra.mrb[0].mxu0 %v562
      %v691 = vpop.f32.mrb[0].mxu0
      %v692 = vadd.f32 %v593, %v691
      %v693 = vpop.f32.mrb[0].mxu0
      %694 = vmatprep.mubr.f32.mxu0 0.0
      %695 = vmatmul.mubr.f32.gmra.mrb[0].mxu0 %v563
      %v696 = vpop.f32.mrb[0].mxu0
      %v697 = vadd.f32 %v593, %v696
      %v698 = vpop.f32.mrb[0].mxu0
      %699 = vmatprep.mubr.f32.mxu0 0.0
      %700 = vmatmul.mubr.f32.gmra.mrb[0].mxu0 %v564
      %v701 = vpop.f32.mrb[0].mxu0
      %v702 = vadd.f32 %v593, %v701
      %v703 = vpop.f32.mrb[0].mxu0
      %704 = vmatprep.mubr.f32.mxu0 0.0
      %705 = vmatmul.mubr.f32.gmra.mrb[0].mxu0 %v565
      %v706 = vpop.f32.mrb[0].mxu0
      %v707 = vadd.f32 %v593, %v706
      %v708 = vpop.f32.mrb[0].mxu0
      %709 = vmatprep.mubr.f32.mxu0 0.0
      %710 = vmatmul.mubr.f32.gmra.mrb[0].mxu0 %v566
      %v711 = vpop.f32.mrb[0].mxu0
      %v712 = vadd.f32 %v593, %v711
      %v713 = vpop.f32.mrb[0].mxu0
      %714 = vmatprep.mubr.f32.mxu0 0.0
      %715 = vmatmul.mubr.f32.gmra.mrb[0].mxu0 %v567
      %v716 = vpop.f32.mrb[0].mxu0
      %v717 = vadd.f32 %v593, %v716
      %v718 = vpop.f32.mrb[0].mxu0
      %719 = vmatprep.mubr.f32.mxu0 0.0
      %720 = vmatmul.mubr.f32.gmra.mrb[0].mxu0 %v568
      %v721 = vpop.f32.mrb[0].mxu0
      %v722 = vadd.f32 %v593, %v721
      %v723 = vpop.f32.mrb[0].mxu0
      %724 = vmatprep.mubr.f32.mxu0 0.0
      %725 = vmatmul.mubr.f32.gmra.mrb[0].mxu0 %v569
      %v726 = vpop.f32.mrb[0].mxu0
      %v727 = vadd.f32 %v593, %v726
      %v728 = vpop.f32.mrb[0].mxu0
      %729 = vmatprep.mubr.f32.mxu0 0.0
      %730 = vmatmul.mubr.f32.gmra.mrb[0].mxu0 %v570
      %v731 = vpop.f32.mrb[0].mxu0
      %v732 = vadd.f32 %v593, %v731
      %v733 = vpop.f32.mrb[0].mxu0
      %734 = vmatprep.mubr.f32.mxu0 0.0
      %735 = vmatmul.mubr.f32.gmra.mrb[0].mxu0 %v571
      %v736 = vpop.f32.mrb[0].mxu0
      %v737 = vadd.f32 %v593, %v736
      %v738 = vpop.f32.mrb[0].mxu0
      %739 = vdwg.mxu0
      %v740 = vmax.f32 %v662, 0.0
      %v741 = vmax.f32 %v667, 0.0
      %v742 = vmax.f32 %v672, 0.0
      %v743 = vmax.f32 %v677, 0.0
      %v744 = vmax.f32 %v682, 0.0
      %v745 = vmax.f32 %v687, 0.0
      %v746 = vmax.f32 %v692, 0.0
      %v747 = vmax.f32 %v697, 0.0
      %v748 = vmax.f32 %v702, 0.0
      %v749 = vmax.f32 %v707, 0.0
      %v750 = vmax.f32 %v712, 0.0
      %v751 = vmax.f32 %v717, 0.0
      %v752 = vmax.f32 %v722, 0.0
      %v753 = vmax.f32 %v727, 0.0
      %v754 = vmax.f32 %v732, 0.0
      %v755 = vmax.f32 %v737, 0.0
      %v756 = vld [vmem:[%s5] sm:$0xff]
      %v757 = vld [vmem:[%s5 + $0x8] sm:$0xff]
      %v758 = vld [vmem:[%s5 + $0x10] sm:$0xff]
      %v759 = vld [vmem:[%s5 + $0x18] sm:$0xff]
      %v760 = vld [vmem:[%s5 + $0x20] sm:$0xff]
      %v761 = vld [vmem:[%s5 + $0x28] sm:$0xff]
      %v762 = vld [vmem:[%s5 + $0x30] sm:$0xff]
      %v763 = vld [vmem:[%s5 + $0x38] sm:$0xff]
      %v764 = vld [vmem:[%s5 + $0x40] sm:$0xff]
      %v765 = vld [vmem:[%s5 + $0x48] sm:$0xff]
      %v766 = vld [vmem:[%s5 + $0x50] sm:$0xff]
      %v767 = vld [vmem:[%s5 + $0x58] sm:$0xff]
      %v768 = vld [vmem:[%s5 + $0x60] sm:$0xff]
      %v769 = vld [vmem:[%s5 + $0x68] sm:$0xff]
      %v770 = vld [vmem:[%s5 + $0x70] sm:$0xff]
      %v771 = vld [vmem:[%s5 + $0x78] sm:$0xff]
      %v772 = vld [vmem:[%s6] sm:$0x1]
      %v774 = vlaneseq
      %v775 = vshrl.u32 %v774, 7
      %v776 = vsub.s32 0, %v775
      %v777 = vrot.slane %v772, %v776
      %779 = vmatprep.subr.mxu0 0.0
      %780 = vmatpush1.msra.mxu0 %v756
      %781 = vmatprep.subr.mxu0 0.0
      %782 = vmatpush1.msra.mxu0 %v757
      %783 = vmatprep.subr.mxu0 0.0
      %784 = vmatpush1.msra.mxu0 %v758
      %785 = vmatprep.subr.mxu0 0.0
      %786 = vmatpush1.msra.mxu0 %v759
      %787 = vmatprep.subr.mxu0 0.0
      %788 = vmatpush1.msra.mxu0 %v760
      %789 = vmatprep.subr.mxu0 0.0
      %790 = vmatpush1.msra.mxu0 %v761
      %791 = vmatprep.subr.mxu0 0.0
      %792 = vmatpush1.msra.mxu0 %v762
      %793 = vmatprep.subr.mxu0 0.0
      %794 = vmatpush1.msra.mxu0 %v763
      %795 = vmatprep.subr.mxu0 0.0
      %796 = vmatpush1.msra.mxu0 %v764
      %797 = vmatprep.subr.mxu0 0.0
      %798 = vmatpush1.msra.mxu0 %v765
      %799 = vmatprep.subr.mxu0 0.0
      %800 = vmatpush1.msra.mxu0 %v766
      %801 = vmatprep.subr.mxu0 0.0
      %802 = vmatpush1.msra.mxu0 %v767
      %803 = vmatprep.subr.mxu0 0.0
      %804 = vmatpush1.msra.mxu0 %v768
      %805 = vmatprep.subr.mxu0 0.0
      %806 = vmatpush1.msra.mxu0 %v769
      %807 = vmatprep.subr.mxu0 0.0
      %808 = vmatpush1.msra.mxu0 %v770
      %809 = vmatprep.subr.mxu0 0.0
      %810 = vmatpush1.msra.mxu0 %v771
      %811 = vmatprep.subr.mxu0 0.0
      %812 = vmatpush1.msra.mxu0 0.0
      %813 = vmatprep.subr.mxu0 0.0
      %814 = vmatpush1.msra.mxu0 0.0
      %815 = vmatprep.subr.mxu0 0.0
      %816 = vmatpush1.msra.mxu0 0.0
      %817 = vmatprep.subr.mxu0 0.0
      %818 = vmatpush1.msra.mxu0 0.0
      %819 = vmatprep.subr.mxu0 0.0
      %820 = vmatpush1.msra.mxu0 0.0
      %821 = vmatprep.subr.mxu0 0.0
      %822 = vmatpush1.msra.mxu0 0.0
      %823 = vmatprep.subr.mxu0 0.0
      %824 = vmatpush1.msra.mxu0 0.0
      %825 = vmatprep.subr.mxu0 0.0
      %826 = vmatpush1.msra.mxu0 0.0
      %827 = vmatprep.subr.mxu0 0.0
      %828 = vmatpush1.msra.mxu0 0.0
      %829 = vmatprep.subr.mxu0 0.0
      %830 = vmatpush1.msra.mxu0 0.0
      %831 = vmatprep.subr.mxu0 0.0
      %832 = vmatpush1.msra.mxu0 0.0
      %833 = vmatprep.subr.mxu0 0.0
      %834 = vmatpush1.msra.mxu0 0.0
      %835 = vmatprep.subr.mxu0 0.0
      %836 = vmatpush1.msra.mxu0 0.0
      %837 = vmatprep.subr.mxu0 0.0
      %838 = vmatpush1.msra.mxu0 0.0
      %839 = vmatprep.subr.mxu0 0.0
      %840 = vmatpush1.msra.mxu0 0.0
      %841 = vmatprep.subr.mxu0 0.0
      %842 = vmatpush1.msra.mxu0 0.0
      %843 = vmatprep.mubr.f32.mxu0 0.0
      %844 = vmatmul.mubr.f32.gmra.mrb[0].mxu0 %v740
      %v845 = vpop.f32.mrb[0].mxu0
      %v846 = vadd.f32 %v777, %v845
      %v847 = vpop.f32.mrb[0].mxu0
      %848 = vmatprep.mubr.f32.mxu0 0.0
      %849 = vmatmul.mubr.f32.gmra.mrb[0].mxu0 %v741
      %v850 = vpop.f32.mrb[0].mxu0
      %v851 = vadd.f32 %v777, %v850
      %v852 = vpop.f32.mrb[0].mxu0
      %853 = vmatprep.mubr.f32.mxu0 0.0
      %854 = vmatmul.mubr.f32.gmra.mrb[0].mxu0 %v742
      %v855 = vpop.f32.mrb[0].mxu0
      %v856 = vadd.f32 %v777, %v855
      %v857 = vpop.f32.mrb[0].mxu0
      %858 = vmatprep.mubr.f32.mxu0 0.0
      %859 = vmatmul.mubr.f32.gmra.mrb[0].mxu0 %v743
      %v860 = vpop.f32.mrb[0].mxu0
      %v861 = vadd.f32 %v777, %v860
      %v862 = vpop.f32.mrb[0].mxu0
      %863 = vmatprep.mubr.f32.mxu0 0.0
      %864 = vmatmul.mubr.f32.gmra.mrb[0].mxu0 %v744
      %v865 = vpop.f32.mrb[0].mxu0
      %v866 = vadd.f32 %v777, %v865
      %v867 = vpop.f32.mrb[0].mxu0
      %868 = vmatprep.mubr.f32.mxu0 0.0
      %869 = vmatmul.mubr.f32.gmra.mrb[0].mxu0 %v745
      %v870 = vpop.f32.mrb[0].mxu0
      %v871 = vadd.f32 %v777, %v870
      %v872 = vpop.f32.mrb[0].mxu0
      %873 = vmatprep.mubr.f32.mxu0 0.0
      %874 = vmatmul.mubr.f32.gmra.mrb[0].mxu0 %v746
      %v875 = vpop.f32.mrb[0].mxu0
      %v876 = vadd.f32 %v777, %v875
      %v877 = vpop.f32.mrb[0].mxu0
      %878 = vmatprep.mubr.f32.mxu0 0.0
      %879 = vmatmul.mubr.f32.gmra.mrb[0].mxu0 %v747
      %v880 = vpop.f32.mrb[0].mxu0
      %v881 = vadd.f32 %v777, %v880
      %v882 = vpop.f32.mrb[0].mxu0
      %883 = vmatprep.mubr.f32.mxu0 0.0
      %884 = vmatmul.mubr.f32.gmra.mrb[0].mxu0 %v748
      %v885 = vpop.f32.mrb[0].mxu0
      %v886 = vadd.f32 %v777, %v885
      %v887 = vpop.f32.mrb[0].mxu0
      %888 = vmatprep.mubr.f32.mxu0 0.0
      %889 = vmatmul.mubr.f32.gmra.mrb[0].mxu0 %v749
      %v890 = vpop.f32.mrb[0].mxu0
      %v891 = vadd.f32 %v777, %v890
      %v892 = vpop.f32.mrb[0].mxu0
      %893 = vmatprep.mubr.f32.mxu0 0.0
      %894 = vmatmul.mubr.f32.gmra.mrb[0].mxu0 %v750
      %v895 = vpop.f32.mrb[0].mxu0
      %v896 = vadd.f32 %v777, %v895
      %v897 = vpop.f32.mrb[0].mxu0
      %898 = vmatprep.mubr.f32.mxu0 0.0
      %899 = vmatmul.mubr.f32.gmra.mrb[0].mxu0 %v751
      %v900 = vpop.f32.mrb[0].mxu0
      %v901 = vadd.f32 %v777, %v900
      %v902 = vpop.f32.mrb[0].mxu0
      %903 = vmatprep.mubr.f32.mxu0 0.0
      %904 = vmatmul.mubr.f32.gmra.mrb[0].mxu0 %v752
      %v905 = vpop.f32.mrb[0].mxu0
      %v906 = vadd.f32 %v777, %v905
      %v907 = vpop.f32.mrb[0].mxu0
      %908 = vmatprep.mubr.f32.mxu0 0.0
      %909 = vmatmul.mubr.f32.gmra.mrb[0].mxu0 %v753
      %v910 = vpop.f32.mrb[0].mxu0
      %v911 = vadd.f32 %v777, %v910
      %v912 = vpop.f32.mrb[0].mxu0
      %913 = vmatprep.mubr.f32.mxu0 0.0
      %914 = vmatmul.mubr.f32.gmra.mrb[0].mxu0 %v754
      %v915 = vpop.f32.mrb[0].mxu0
      %v916 = vadd.f32 %v777, %v915
      %v917 = vpop.f32.mrb[0].mxu0
      %918 = vmatprep.mubr.f32.mxu0 0.0
      %919 = vmatmul.mubr.f32.gmra.mrb[0].mxu0 %v755
      %v920 = vpop.f32.mrb[0].mxu0
      %v921 = vadd.f32 %v777, %v920
      %v922 = vpop.f32.mrb[0].mxu0
      %923 = vdwg.mxu0
      %v924 = vmax.f32 %v846, 0.0
      %v925 = vmax.f32 %v851, 0.0
      %v926 = vmax.f32 %v856, 0.0
      %v927 = vmax.f32 %v861, 0.0
      %v928 = vmax.f32 %v866, 0.0
      %v929 = vmax.f32 %v871, 0.0
      %v930 = vmax.f32 %v876, 0.0
      %v931 = vmax.f32 %v881, 0.0
      %v932 = vmax.f32 %v886, 0.0
      %v933 = vmax.f32 %v891, 0.0
      %v934 = vmax.f32 %v896, 0.0
      %v935 = vmax.f32 %v901, 0.0
      %v936 = vmax.f32 %v906, 0.0
      %v937 = vmax.f32 %v911, 0.0
      %v938 = vmax.f32 %v916, 0.0
      %v939 = vmax.f32 %v921, 0.0
      %v940 = vld [vmem:[%s7] sm:$0xff]
      %v941 = vld [vmem:[#allocation2] sm:$0x1]
      %v943 = vlaneseq
      %v944 = vshrl.u32 %v943, 7
      %v945 = vsub.s32 0, %v944
      %v946 = vrot.slane %v941, %v945
      %947 = vset.pattern.permute.xlu0 0
      %948 = vperm.xlu0 %947, %v946
      %v949 = vpop.permute.xlu0 %948
      %951 = vmatprep.subr.mxu0 0.0
      %952 = vmatpush1.xpose.msra.mxu0 %v924
      %953 = vmatprep.subr.mxu0 0.0
      %954 = vmatpush1.xpose.msra.mxu0 %v925
      %955 = vmatprep.subr.mxu0 0.0
      %956 = vmatpush1.xpose.msra.mxu0 %v926
      %957 = vmatprep.subr.mxu0 0.0
      %958 = vmatpush1.xpose.msra.mxu0 %v927
      %959 = vmatprep.subr.mxu0 0.0
      %960 = vmatpush1.xpose.msra.mxu0 %v928
      %961 = vmatprep.subr.mxu0 0.0
      %962 = vmatpush1.xpose.msra.mxu0 %v929
      %963 = vmatprep.subr.mxu0 0.0
      %964 = vmatpush1.xpose.msra.mxu0 %v930
      %965 = vmatprep.subr.mxu0 0.0
      %966 = vmatpush1.xpose.msra.mxu0 %v931
      %967 = vmatprep.subr.mxu0 0.0
      %968 = vmatpush1.xpose.msra.mxu0 %v932
      %969 = vmatprep.subr.mxu0 0.0
      %970 = vmatpush1.xpose.msra.mxu0 %v933
      %971 = vmatprep.subr.mxu0 0.0
      %972 = vmatpush1.xpose.msra.mxu0 %v934
      %973 = vmatprep.subr.mxu0 0.0
      %974 = vmatpush1.xpose.msra.mxu0 %v935
      %975 = vmatprep.subr.mxu0 0.0
      %976 = vmatpush1.xpose.msra.mxu0 %v936
      %977 = vmatprep.subr.mxu0 0.0
      %978 = vmatpush1.xpose.msra.mxu0 %v937
      %979 = vmatprep.subr.mxu0 0.0
      %980 = vmatpush1.xpose.msra.mxu0 %v938
      %981 = vmatprep.subr.mxu0 0.0
      %982 = vmatpush1.xpose.msra.mxu0 %v939
      %983 = vmatprep.subr.mxu0 0.0
      %984 = vmatpush1.xpose.msra.mxu0 0.0
      %985 = vmatprep.subr.mxu0 0.0
      %986 = vmatpush1.xpose.msra.mxu0 0.0
      %987 = vmatprep.subr.mxu0 0.0
      %988 = vmatpush1.xpose.msra.mxu0 0.0
      %989 = vmatprep.subr.mxu0 0.0
      %990 = vmatpush1.xpose.msra.mxu0 0.0
      %991 = vmatprep.subr.mxu0 0.0
      %992 = vmatpush1.xpose.msra.mxu0 0.0
      %993 = vmatprep.subr.mxu0 0.0
      %994 = vmatpush1.xpose.msra.mxu0 0.0
      %995 = vmatprep.subr.mxu0 0.0
      %996 = vmatpush1.xpose.msra.mxu0 0.0
      %997 = vmatprep.subr.mxu0 0.0
      %998 = vmatpush1.xpose.msra.mxu0 0.0
      %999 = vmatprep.subr.mxu0 0.0
      %1000 = vmatpush1.xpose.msra.mxu0 0.0
      %1001 = vmatprep.subr.mxu0 0.0
      %1002 = vmatpush1.xpose.msra.mxu0 0.0
      %1003 = vmatprep.subr.mxu0 0.0
      %1004 = vmatpush1.xpose.msra.mxu0 0.0
      %1005 = vmatprep.subr.mxu0 0.0
      %1006 = vmatpush1.xpose.msra.mxu0 0.0
      %1007 = vmatprep.subr.mxu0 0.0
      %1008 = vmatpush1.xpose.msra.mxu0 0.0
      %1009 = vmatprep.subr.mxu0 0.0
      %1010 = vmatpush1.xpose.msra.mxu0 0.0
      %1011 = vmatprep.subr.mxu0 0.0
      %1012 = vmatpush1.xpose.msra.mxu0 0.0
      %1013 = vmatprep.subr.mxu0 0.0
      %1014 = vmatpush1.xpose.msra.mxu0 0.0
      %1015 = vmatprep.mubr.f32.mxu0 0.0
      %1016 = vmatmul.mubr.f32.gmra.mrb[0].mxu0 %v940
      %v1017 = vpop.f32.mrb[0].mxu0
      %v1018 = vadd.f32 %v949, %v1017
      %v1019 = vpop.f32.mrb[0].mxu0
      %1020 = vdwg.mxu0
      %1021 = vst [vmem:[%s334] sm:$0xff] %v1018
      %p1022 = scmp.lt.s32.totalorder %s22, 1
      %s1023 = scalar_select %p1022, %s22, 1
      %s1024 = smul.addr %s1023, 8
      %s1025 = scalar_lea.vmem %s9, %s1024
      // Predicated region
      $region57: #{mlp_forward.1} parent=55 // pred_check
        %p1026 = pneg %p234
      $region58: #{mlp_forward.1} parent=55 // pred_check_branch
        %1028 = sbr.rel (%p1026) target = $region60
      $region59: #{mlp_forward.1} parent=55 // pred_region
        _
      $region60: #{mlp_forward.1} parent=55 // pred_fallthru
        _
    $region56: #{mlp_forward.1} parent=5 // pred_fallthru
      _
    %p1029 = scmp.le.s32.totalorder 2, %s17
    // Predicated region
    $region61: #{mlp_forward.1} parent=5 // pred_check
      %p1030 = pneg %p1029
    $region62: #{mlp_forward.1} parent=5 // pred_check_branch
      %1032 = sbr.rel (%p1030) target = $region64
    $region63: #{mlp_forward.1} parent=5 // pred_region
      %s1033 = ssub.s32 %s17, 2
      // Predicated region
      $region65: #{mlp_forward.1} parent=63 // pred_check
        %p1034 = pneg %p240
      $region66: #{mlp_forward.1} parent=63 // pred_check_branch
        %1036 = sbr.rel (%p1034) target = $region68
      $region67: #{mlp_forward.1} parent=63 // pred_region
        %p1037 = scmp.lt.s32.totalorder %s23, 1
        %s1038 = scalar_select %p1037, %s23, 1
        %s1039 = smul.addr %s1038, 8
        %s1040 = scalar_lea.vmem %s9, %s1039
      $region68: #{mlp_forward.1} parent=63 // pred_fallthru
        _
    $region64: #{mlp_forward.1} parent=5 // pred_fallthru
      _
  $region6: #{mlp_forward.1} parent=0 // loop_footer
    %s21 = sadd.s32 1, %s17
  $region7: #{mlp_forward.1} parent=0 // loop_footer_branch
    %16 = sbr.rel target = $region3
  $region8: #{mlp_forward.1} parent=0 // loop_exit
    _

</llo_original>
